<compile_context>
chip_gen: v7x
topology: tpu7x:2x2x1
jax: 0.10.0
libtpu: 0.0.40
codegen_flags: <defaults>
</compile_context>

<pallas_src>
import jax
import jax.numpy as jnp
from jax.experimental import pallas as pl
from jax.experimental.pallas import tpu as pltpu


def ffn_kernel(x_ref, w1_ref, b1_ref, w2_ref, b2_ref, wp_ref, bp_ref,
               o_ref, acc_ref):
    h = pl.program_id(1)

    @pl.when(h == 0)
    def _():
        acc_ref[...] = jnp.zeros_like(acc_ref)

    x = x_ref[...]                                                  # (tm, C) bf16
    # Gate and value branches for this H-chunk (MXU, f32 accumulation).
    h1 = jnp.dot(x, w1_ref[...], preferred_element_type=jnp.float32) + b1_ref[...]
    h2 = jnp.dot(x, w2_ref[...], preferred_element_type=jnp.float32) + b2_ref[...]
    # SwiGLU epilogue in f32: linear1(x) * silu(linear2(x)).
    gated = h1 * (h2 * jax.nn.sigmoid(h2))                          # (tm, th) f32
    # Accumulate this chunk's contribution to the output projection.
    acc_ref[...] += jnp.dot(gated.astype(wp_ref.dtype), wp_ref[...],
                            preferred_element_type=jnp.float32)

    @pl.when(h == pl.num_programs(1) - 1)
    def _():
        o_ref[...] = (acc_ref[...] + bp_ref[...]).astype(o_ref.dtype)


def ffn_pallas(x, w1, b1, w2, b2, wp, bp, *, tm=256, th=None,
               vmem_limit_bytes=48 * 1024 * 1024):
    """x: (B, T, C) f32. Weights in (in, out) layout. Returns (B, T, C) f32."""
    B, T, C = x.shape
    H = w1.shape[1]                                   # 4 * C

    # H-chunk: multiple of 128 (lane-dense), or the full H if H is small.
    if th is None:
        th = H if H <= 512 else 512
    assert H % th == 0, "hidden dim must be divisible by the H-chunk"
    assert th == H or th % 128 == 0, "H-chunk must be lane-dense (multiple of 128)"

    N = B * T
    grid_m = pl.cdiv(N, tm)
    n_pad = grid_m * tm

    # bf16 MXU inputs; biases stay f32 for the f32 epilogue.
    xf = x.reshape(N, C).astype(jnp.bfloat16)
    if n_pad != N:
        xf = jnp.pad(xf, ((0, n_pad - N), (0, 0)))
    w1b = w1.astype(jnp.bfloat16)
    w2b = w2.astype(jnp.bfloat16)
    wpb = wp.astype(jnp.bfloat16)
    b1_2d = b1.reshape(1, H).astype(jnp.float32)
    b2_2d = b2.reshape(1, H).astype(jnp.float32)
    bp_2d = bp.reshape(1, C).astype(jnp.float32)

    out_flat = pl.pallas_call(
        ffn_kernel,
        out_shape=jax.ShapeDtypeStruct((n_pad, C), jnp.float32),
        grid_spec=pltpu.PrefetchScalarGridSpec(
            num_scalar_prefetch=0,
            grid=(grid_m, H // th),
            in_specs=[
                pl.BlockSpec((tm, C), lambda i, h: (i, 0)),   # x row tile (reused over h)
                pl.BlockSpec((C, th), lambda i, h: (0, h)),   # W1 chunk
                pl.BlockSpec((1, th), lambda i, h: (0, h)),   # b1 chunk
                pl.BlockSpec((C, th), lambda i, h: (0, h)),   # W2 chunk
                pl.BlockSpec((1, th), lambda i, h: (0, h)),   # b2 chunk
                pl.BlockSpec((th, C), lambda i, h: (h, 0)),   # Wp chunk
                pl.BlockSpec((1, C), lambda i, h: (0, 0)),    # bp
            ],
            out_specs=pl.BlockSpec((tm, C), lambda i, h: (i, 0)),
            scratch_shapes=[pltpu.VMEM((tm, C), jnp.float32)],
        ),
        compiler_params=pltpu.CompilerParams(
            dimension_semantics=("parallel", "arbitrary"),
            vmem_limit_bytes=vmem_limit_bytes,
        ),
    )(xf, w1b, b1_2d, w2b, b2_2d, wpb, bp_2d)

    return out_flat[:N].reshape(B, T, C)


def ffn_reference(x, w1, b1, w2, b2, wp, bp):
    h1 = x @ w1 + b1
    h2 = x @ w2 + b2
    gated = h1 * jax.nn.silu(h2)
    return gated @ wp + bp


if __name__ == "__main__":
    # Small config: batch=2, seq=8, n_embd=32 -> hidden = 4*32 = 128
    B, T, C = 2, 8, 32
    H = 4 * C

    key = jax.random.PRNGKey(0)
    kx, k1, kb1, k2, kb2, kp, kbp = jax.random.split(key, 7)

    x = jax.random.normal(kx, (B, T, C), dtype=jnp.float32)
    # Deterministic param init (roughly matching nn.Linear scale).
    w1 = jax.random.normal(k1, (C, H), dtype=jnp.float32) * (1.0 / (C ** 0.5))
    b1 = jax.random.normal(kb1, (H,), dtype=jnp.float32) * 0.01
    w2 = jax.random.normal(k2, (C, H), dtype=jnp.float32) * (1.0 / (C ** 0.5))
    b2 = jax.random.normal(kb2, (H,), dtype=jnp.float32) * 0.01
    wp = jax.random.normal(kp, (H, C), dtype=jnp.float32) * (1.0 / (H ** 0.5))
    bp = jax.random.normal(kbp, (C,), dtype=jnp.float32) * 0.01

    y = ffn_pallas(x, w1, b1, w2, b2, wp, bp)
    jax.block_until_ready(y)

    y_ref = ffn_reference(x, w1, b1, w2, b2, wp, bp)
    assert y.shape == (B, T, C)
    # bf16 MXU inputs -> loosened tolerance vs f32 reference.
    assert jnp.allclose(y, y_ref, atol=5e-2, rtol=5e-2), "mismatch vs reference"

    print("KERNEL_OK")
</pallas_src>

<mosaic_0001>
module attributes {stable_mosaic.version = 11 : i64} {
  func.func @ffn_kernel(%arg0: i32, %arg1: i32, %arg2: memref<256x32xbf16, #tpu.memory_space<vmem>>, %arg3: memref<32x128xbf16, #tpu.memory_space<vmem>>, %arg4: memref<1x128xf32, #tpu.memory_space<vmem>>, %arg5: memref<32x128xbf16, #tpu.memory_space<vmem>>, %arg6: memref<1x128xf32, #tpu.memory_space<vmem>>, %arg7: memref<128x32xbf16, #tpu.memory_space<vmem>>, %arg8: memref<1x32xf32, #tpu.memory_space<vmem>>, %arg9: memref<256x32xf32, #tpu.memory_space<vmem>>, %arg10: memref<256x32xf32, #tpu.memory_space<vmem>>) attributes {dimension_semantics = [#tpu.dimension_semantics<parallel>, #tpu.dimension_semantics<arbitrary>], iteration_bounds = array<i64: 1, 1>, scalar_prefetch = 0 : i64, scratch_operands = 1 : i64, tpu.core_type = #tpu.core_type<tc>, window_params = [{transform_indices = @transform_0, window_bounds = array<i64: 256, 32>}, {transform_indices = @transform_1, window_bounds = array<i64: 32, 128>}, {transform_indices = @transform_2, window_bounds = array<i64: 1, 128>}, {transform_indices = @transform_3, window_bounds = array<i64: 32, 128>}, {transform_indices = @transform_4, window_bounds = array<i64: 1, 128>}, {transform_indices = @transform_5, window_bounds = array<i64: 128, 32>}, {pipeline_mode = #tpu.pipeline_mode<synchronous>, transform_indices = @transform_6, window_bounds = array<i64: 1, 32>}, {transform_indices = @transform_7, window_bounds = array<i64: 256, 32>}]} {
    %c0_i32 = arith.constant 0 : i32
    %0 = arith.cmpi eq, %arg1, %c0_i32 : i32
    %1 = arith.extui %0 : i1 to i32
    %c0_i32_0 = arith.constant 0 : i32
    %2 = arith.cmpi ne, %1, %c0_i32_0 : i32
    scf.if %2 {
      %cst_21 = arith.constant 0.000000e+00 : f32
      %30 = vector.broadcast %cst_21 : f32 to vector<256x32xf32>
      %c0_22 = arith.constant 0 : index
      %c0_23 = arith.constant 0 : index
      %31 = vector.load %arg10[%c0_22, %c0_23] : memref<256x32xf32, #tpu.memory_space<vmem>>, vector<256x32xf32>
      tpu.vector_store %arg10[%c0_22, %c0_23], %30 {strides = array<i32>} : memref<256x32xf32, #tpu.memory_space<vmem>>, vector<256x32xf32>,
    } else {
    }
    %c0 = arith.constant 0 : index
    %c0_1 = arith.constant 0 : index
    %3 = vector.load %arg2[%c0, %c0_1] : memref<256x32xbf16, #tpu.memory_space<vmem>>, vector<256x32xbf16>
    %c0_2 = arith.constant 0 : index
    %c0_3 = arith.constant 0 : index
    %4 = vector.load %arg3[%c0_2, %c0_3] : memref<32x128xbf16, #tpu.memory_space<vmem>>, vector<32x128xbf16>
    %cst = arith.constant dense<0.000000e+00> : vector<256x128xf32>
    %5 = tpu.matmul %3, %4, %cst {dimension_numbers = #tpu.dot_dimension_numbers<[1], [0], [0], [1], [0, 0, 1, 1], [], []>} : vector<256x32xbf16>, vector<32x128xbf16>, vector<256x128xf32> -> vector<256x128xf32>
    %c0_4 = arith.constant 0 : index
    %c0_5 = arith.constant 0 : index
    %6 = vector.load %arg4[%c0_4, %c0_5] : memref<1x128xf32, #tpu.memory_space<vmem>>, vector<1x128xf32>
    %7 = vector.broadcast %6 : vector<1x128xf32> to vector<256x128xf32>
    %8 = arith.addf %5, %7 : vector<256x128xf32>
    %c0_6 = arith.constant 0 : index
    %c0_7 = arith.constant 0 : index
    %9 = vector.load %arg5[%c0_6, %c0_7] : memref<32x128xbf16, #tpu.memory_space<vmem>>, vector<32x128xbf16>
    %cst_8 = arith.constant dense<0.000000e+00> : vector<256x128xf32>
    %10 = tpu.matmul %3, %9, %cst_8 {dimension_numbers = #tpu.dot_dimension_numbers<[1], [0], [0], [1], [0, 0, 1, 1], [], []>} : vector<256x32xbf16>, vector<32x128xbf16>, vector<256x128xf32> -> vector<256x128xf32>
    %c0_9 = arith.constant 0 : index
    %c0_10 = arith.constant 0 : index
    %11 = vector.load %arg6[%c0_9, %c0_10] : memref<1x128xf32, #tpu.memory_space<vmem>>, vector<1x128xf32>
    %12 = vector.broadcast %11 : vector<1x128xf32> to vector<256x128xf32>
    %13 = arith.addf %10, %12 : vector<256x128xf32>
    %14 = arith.negf %13 : vector<256x128xf32>
    %15 = math.exp %14 : vector<256x128xf32>
    %cst_11 = arith.constant 1.000000e+00 : f32
    %16 = vector.broadcast %cst_11 : f32 to vector<256x128xf32>
    %17 = arith.addf %16, %15 : vector<256x128xf32>
    %18 = arith.divf %16, %17 : vector<256x128xf32>
    %19 = arith.mulf %13, %18 : vector<256x128xf32>
    %20 = arith.mulf %8, %19 : vector<256x128xf32>
    %c0_12 = arith.constant 0 : index
    %c0_13 = arith.constant 0 : index
    %21 = vector.load %arg10[%c0_12, %c0_13] : memref<256x32xf32, #tpu.memory_space<vmem>>, vector<256x32xf32>
    %22 = arith.truncf %20 : vector<256x128xf32> to vector<256x128xbf16>
    %c0_14 = arith.constant 0 : index
    %c0_15 = arith.constant 0 : index
    %23 = vector.load %arg7[%c0_14, %c0_15] : memref<128x32xbf16, #tpu.memory_space<vmem>>, vector<128x32xbf16>
    %cst_16 = arith.constant dense<0.000000e+00> : vector<256x32xf32>
    %24 = tpu.matmul %22, %23, %cst_16 {dimension_numbers = #tpu.dot_dimension_numbers<[1], [0], [0], [1], [0, 0, 1, 1], [], []>} : vector<256x128xbf16>, vector<128x32xbf16>, vector<256x32xf32> -> vector<256x32xf32>
    %25 = arith.addf %21, %24 : vector<256x32xf32>
    %c0_17 = arith.constant 0 : index
    %c0_18 = arith.constant 0 : index
    %26 = vector.load %arg10[%c0_17, %c0_18] : memref<256x32xf32, #tpu.memory_space<vmem>>, vector<256x32xf32>
    tpu.vector_store %arg10[%c0_17, %c0_18], %25 {strides = array<i32>} : memref<256x32xf32, #tpu.memory_space<vmem>>, vector<256x32xf32>,
    %c0_i32_19 = arith.constant 0 : i32
    %27 = arith.cmpi eq, %arg1, %c0_i32_19 : i32
    %28 = arith.extui %27 : i1 to i32
    %c0_i32_20 = arith.constant 0 : i32
    %29 = arith.cmpi ne, %28, %c0_i32_20 : i32
    scf.if %29 {
      %c0_21 = arith.constant 0 : index
      %c0_22 = arith.constant 0 : index
      %30 = vector.load %arg10[%c0_21, %c0_22] : memref<256x32xf32, #tpu.memory_space<vmem>>, vector<256x32xf32>
      %c0_23 = arith.constant 0 : index
      %c0_24 = arith.constant 0 : index
      %31 = vector.load %arg8[%c0_23, %c0_24] : memref<1x32xf32, #tpu.memory_space<vmem>>, vector<1x32xf32>
      %32 = vector.broadcast %31 : vector<1x32xf32> to vector<256x32xf32>
      %33 = arith.addf %30, %32 : vector<256x32xf32>
      %c0_25 = arith.constant 0 : index
      %c0_26 = arith.constant 0 : index
      %34 = vector.load %arg9[%c0_25, %c0_26] : memref<256x32xf32, #tpu.memory_space<vmem>>, vector<256x32xf32>
      tpu.vector_store %arg9[%c0_25, %c0_26], %33 {strides = array<i32>} : memref<256x32xf32, #tpu.memory_space<vmem>>, vector<256x32xf32>,
    } else {
    }
    return
  }
  func.func @transform_0(%arg0: i32, %arg1: i32) -> (i32, i32) {
    %c0_i32 = arith.constant 0 : i32
    %c0_i32_0 = arith.constant 0 : i32
    return %arg0, %c0_i32 : i32, i32
  }
  func.func @transform_1(%arg0: i32, %arg1: i32) -> (i32, i32) {
    %c0_i32 = arith.constant 0 : i32
    %c0_i32_0 = arith.constant 0 : i32
    return %c0_i32, %arg1 : i32, i32
  }
  func.func @transform_2(%arg0: i32, %arg1: i32) -> (i32, i32) {
    %c0_i32 = arith.constant 0 : i32
    %c0_i32_0 = arith.constant 0 : i32
    return %c0_i32, %arg1 : i32, i32
  }
  func.func @transform_3(%arg0: i32, %arg1: i32) -> (i32, i32) {
    %c0_i32 = arith.constant 0 : i32
    %c0_i32_0 = arith.constant 0 : i32
    return %c0_i32, %arg1 : i32, i32
  }
  func.func @transform_4(%arg0: i32, %arg1: i32) -> (i32, i32) {
    %c0_i32 = arith.constant 0 : i32
    %c0_i32_0 = arith.constant 0 : i32
    return %c0_i32, %arg1 : i32, i32
  }
  func.func @transform_5(%arg0: i32, %arg1: i32) -> (i32, i32) {
    %c0_i32 = arith.constant 0 : i32
    %c0_i32_0 = arith.constant 0 : i32
    return %arg1, %c0_i32 : i32, i32
  }
  func.func @transform_6(%arg0: i32, %arg1: i32) -> (i32, i32) {
    %c0_i32 = arith.constant 0 : i32
    %c0_i32_0 = arith.constant 0 : i32
    %c0_i32_1 = arith.constant 0 : i32
    return %c0_i32, %c0_i32_0 : i32, i32
  }
  func.func @transform_7(%arg0: i32, %arg1: i32) -> (i32, i32) {
    %c0_i32 = arith.constant 0 : i32
    %c0_i32_0 = arith.constant 0 : i32
    return %arg0, %c0_i32 : i32, i32
  }
}

</mosaic_0001>

<llo_original>
// kernel: tpu_custom_call.1
$region0: #{tpu_custom_call.1}
  #allocation0 [shape = 'u32[]', space=smem, size = 0x4, offset = 0x4, fixed_abs, tag = 'smem constant byte address 0x4 - core index']
  #allocation1 [shape = 'u32[144,128]{1,0:T(1,128)}', space=vmem, size = 0x12000, scoped, tag = 'internal scratch']
  #allocation2 [shape = 'f32[256,32]{1,0:T(8,128)}', space=vmem, size = 0x20000, scoped, tag = 'scratch operand']
  %s0 = inlined_call_operand.vmem [shape: bf16[256,32], index: 0, kind: input, shape index: {}]
  %s1 = inlined_call_operand.vmem [shape: bf16[32,128], index: 1, kind: input, shape index: {}]
  %s2 = inlined_call_operand.vmem [shape: f32[1,128], index: 2, kind: input, shape index: {}]
  %s3 = inlined_call_operand.vmem [shape: bf16[32,128], index: 3, kind: input, shape index: {}]
  %s4 = inlined_call_operand.vmem [shape: f32[1,128], index: 4, kind: input, shape index: {}]
  %s5 = inlined_call_operand.vmem [shape: bf16[128,32], index: 5, kind: input, shape index: {}]
  %s6 = inlined_call_operand.vmem [shape: f32[1,32], index: 6, kind: input, shape index: {}]
  %s7 = inlined_call_operand.vmem [shape: f32[256,32], index: 7, kind: output, shape index: {}]
  %s8 = sld [smem:[#allocation0]]
  $region46: #{tpu_custom_call.1} parent=0
    _
  %s10 = ssub.s32 1, %s8
  %s11 = scalar_select 0, %s10, %s8
  // Predicated region
  $region2: #{tpu_custom_call.1} parent=0 // pred_check
    _
  $region3: #{tpu_custom_call.1} parent=0 // pred_check_branch
    %13 = sbr.rel (0) target = $region5
  $region4: #{tpu_custom_call.1} parent=0 // pred_region
    _
  $region5: #{tpu_custom_call.1} parent=0 // pred_fallthru
    _
  // Predicated region
  $region6: #{tpu_custom_call.1} parent=0 // pred_check
    _
  $region7: #{tpu_custom_call.1} parent=0 // pred_check_branch
    %15 = sbr.rel (0) target = $region9
  $region8: #{tpu_custom_call.1} parent=0 // pred_region
    _
  $region9: #{tpu_custom_call.1} parent=0 // pred_fallthru
    _
  // Predicated region
  $region10: #{tpu_custom_call.1} parent=0 // pred_check
    _
  $region11: #{tpu_custom_call.1} parent=0 // pred_check_branch
    %17 = sbr.rel (0) target = $region13
  $region12: #{tpu_custom_call.1} parent=0 // pred_region
    _
  $region13: #{tpu_custom_call.1} parent=0 // pred_fallthru
    _
  // Predicated region
  $region14: #{tpu_custom_call.1} parent=0 // pred_check
    _
  $region15: #{tpu_custom_call.1} parent=0 // pred_check_branch
    %19 = sbr.rel (0) target = $region17
  $region16: #{tpu_custom_call.1} parent=0 // pred_region
    _
  $region17: #{tpu_custom_call.1} parent=0 // pred_fallthru
    _
  // Predicated region
  $region18: #{tpu_custom_call.1} parent=0 // pred_check
    _
  $region19: #{tpu_custom_call.1} parent=0 // pred_check_branch
    %21 = sbr.rel (0) target = $region21
  $region20: #{tpu_custom_call.1} parent=0 // pred_region
    _
  $region21: #{tpu_custom_call.1} parent=0 // pred_fallthru
    _
  // Predicated region
  $region22: #{tpu_custom_call.1} parent=0 // pred_check
    _
  $region23: #{tpu_custom_call.1} parent=0 // pred_check_branch
    %23 = sbr.rel (0) target = $region25
  $region24: #{tpu_custom_call.1} parent=0 // pred_region
    _
  $region25: #{tpu_custom_call.1} parent=0 // pred_fallthru
    _
  // Predicated region
  $region26: #{tpu_custom_call.1} parent=0 // pred_check
    _
  $region27: #{tpu_custom_call.1} parent=0 // pred_check_branch
    %25 = sbr.rel (0) target = $region29
  $region28: #{tpu_custom_call.1} parent=0 // pred_region
    _
  $region29: #{tpu_custom_call.1} parent=0 // pred_fallthru
    _
  %p27 = scmp.eq.s32.totalorder 0, 0
  // Predicated region
  $region30: #{tpu_custom_call.1} parent=0 // pred_check
    %p28 = pneg %p27
  $region31: #{tpu_custom_call.1} parent=0 // pred_check_branch
    %30 = sbr.rel (%p28) target = $region33
  $region32: #{tpu_custom_call.1} parent=0 // pred_region
    %vm31 = vcmask 261120
    %32 = vst.msk [vmem:[#allocation2] sm:$0xff] %vm31, 0.0
    %33 = vst.msk [vmem:[#allocation2 + $0x8] sm:$0xff] %vm31, 0.0
    %34 = vst.msk [vmem:[#allocation2 + $0x10] sm:$0xff] %vm31, 0.0
    %35 = vst.msk [vmem:[#allocation2 + $0x18] sm:$0xff] %vm31, 0.0
    %36 = vst.msk [vmem:[#allocation2 + $0x20] sm:$0xff] %vm31, 0.0
    %37 = vst.msk [vmem:[#allocation2 + $0x28] sm:$0xff] %vm31, 0.0
    %38 = vst.msk [vmem:[#allocation2 + $0x30] sm:$0xff] %vm31, 0.0
    %39 = vst.msk [vmem:[#allocation2 + $0x38] sm:$0xff] %vm31, 0.0
    %40 = vst.msk [vmem:[#allocation2 + $0x40] sm:$0xff] %vm31, 0.0
    %41 = vst.msk [vmem:[#allocation2 + $0x48] sm:$0xff] %vm31, 0.0
    %42 = vst.msk [vmem:[#allocation2 + $0x50] sm:$0xff] %vm31, 0.0
    %43 = vst.msk [vmem:[#allocation2 + $0x58] sm:$0xff] %vm31, 0.0
    %44 = vst.msk [vmem:[#allocation2 + $0x60] sm:$0xff] %vm31, 0.0
    %45 = vst.msk [vmem:[#allocation2 + $0x68] sm:$0xff] %vm31, 0.0
    %46 = vst.msk [vmem:[#allocation2 + $0x70] sm:$0xff] %vm31, 0.0
    %47 = vst.msk [vmem:[#allocation2 + $0x78] sm:$0xff] %vm31, 0.0
    %48 = vst.msk [vmem:[#allocation2 + $0x80] sm:$0xff] %vm31, 0.0
    %49 = vst.msk [vmem:[#allocation2 + $0x88] sm:$0xff] %vm31, 0.0
    %50 = vst.msk [vmem:[#allocation2 + $0x90] sm:$0xff] %vm31, 0.0
    %51 = vst.msk [vmem:[#allocation2 + $0x98] sm:$0xff] %vm31, 0.0
    %52 = vst.msk [vmem:[#allocation2 + $0xa0] sm:$0xff] %vm31, 0.0
    %53 = vst.msk [vmem:[#allocation2 + $0xa8] sm:$0xff] %vm31, 0.0
    %54 = vst.msk [vmem:[#allocation2 + $0xb0] sm:$0xff] %vm31, 0.0
    %55 = vst.msk [vmem:[#allocation2 + $0xb8] sm:$0xff] %vm31, 0.0
    %56 = vst.msk [vmem:[#allocation2 + $0xc0] sm:$0xff] %vm31, 0.0
    %57 = vst.msk [vmem:[#allocation2 + $0xc8] sm:$0xff] %vm31, 0.0
    %58 = vst.msk [vmem:[#allocation2 + $0xd0] sm:$0xff] %vm31, 0.0
    %59 = vst.msk [vmem:[#allocation2 + $0xd8] sm:$0xff] %vm31, 0.0
    %60 = vst.msk [vmem:[#allocation2 + $0xe0] sm:$0xff] %vm31, 0.0
    %61 = vst.msk [vmem:[#allocation2 + $0xe8] sm:$0xff] %vm31, 0.0
    %62 = vst.msk [vmem:[#allocation2 + $0xf0] sm:$0xff] %vm31, 0.0
    %63 = vst.msk [vmem:[#allocation2 + $0xf8] sm:$0xff] %vm31, 0.0
  $region33: #{tpu_custom_call.1} parent=0 // pred_fallthru
    _
  %v64 = vld [vmem:[%s0] sm:$0xf]
  %v65 = vld [vmem:[%s0 + $0x4] sm:$0xf]
  %v66 = vld [vmem:[%s0 + $0x8] sm:$0xf]
  %v67 = vld [vmem:[%s0 + $0xc] sm:$0xf]
  %v68 = vld [vmem:[%s0 + $0x10] sm:$0xf]
  %v69 = vld [vmem:[%s0 + $0x14] sm:$0xf]
  %v70 = vld [vmem:[%s0 + $0x18] sm:$0xf]
  %v71 = vld [vmem:[%s0 + $0x1c] sm:$0xf]
  %v72 = vld [vmem:[%s0 + $0x20] sm:$0xf]
  %v73 = vld [vmem:[%s0 + $0x24] sm:$0xf]
  %v74 = vld [vmem:[%s0 + $0x28] sm:$0xf]
  %v75 = vld [vmem:[%s0 + $0x2c] sm:$0xf]
  %v76 = vld [vmem:[%s0 + $0x30] sm:$0xf]
  %v77 = vld [vmem:[%s0 + $0x34] sm:$0xf]
  %v78 = vld [vmem:[%s0 + $0x38] sm:$0xf]
  %v79 = vld [vmem:[%s0 + $0x3c] sm:$0xf]
  %v80 = vld [vmem:[%s0 + $0x40] sm:$0xf]
  %v81 = vld [vmem:[%s0 + $0x44] sm:$0xf]
  %v82 = vld [vmem:[%s0 + $0x48] sm:$0xf]
  %v83 = vld [vmem:[%s0 + $0x4c] sm:$0xf]
  %v84 = vld [vmem:[%s0 + $0x50] sm:$0xf]
  %v85 = vld [vmem:[%s0 + $0x54] sm:$0xf]
  %v86 = vld [vmem:[%s0 + $0x58] sm:$0xf]
  %v87 = vld [vmem:[%s0 + $0x5c] sm:$0xf]
  %v88 = vld [vmem:[%s0 + $0x60] sm:$0xf]
  %v89 = vld [vmem:[%s0 + $0x64] sm:$0xf]
  %v90 = vld [vmem:[%s0 + $0x68] sm:$0xf]
  %v91 = vld [vmem:[%s0 + $0x6c] sm:$0xf]
  %v92 = vld [vmem:[%s0 + $0x70] sm:$0xf]
  %v93 = vld [vmem:[%s0 + $0x74] sm:$0xf]
  %v94 = vld [vmem:[%s0 + $0x78] sm:$0xf]
  %v95 = vld [vmem:[%s0 + $0x7c] sm:$0xf]
  %v96 = vld [vmem:[%s1] sm:$0xf]
  %v97 = vld [vmem:[%s1 + $0x4] sm:$0xf]
  %v98 = vld [vmem:[%s1 + $0x8] sm:$0xf]
  %v99 = vld [vmem:[%s1 + $0xc] sm:$0xf]
  %v100 = vld [vmem:[%s2] sm:$0x1]
  %v102 = vlaneseq
  %v103 = vshrl.u32 %v102, 7
  %v104 = vsub.s32 0, %v103
  %v105 = vrot.slane %v100, %v104
  %v139 = vunpack.c.l.b16 %v64
  %v140 = vunpack.c.l.b16 %v65
  %v141 = vunpack.c.l.b16 %v66
  %v142 = vunpack.c.l.b16 %v67
  %v143 = vunpack.c.l.b16 %v68
  %v144 = vunpack.c.l.b16 %v69
  %v145 = vunpack.c.l.b16 %v70
  %v146 = vunpack.c.l.b16 %v71
  %v147 = vunpack.c.l.b16 %v72
  %v148 = vunpack.c.l.b16 %v73
  %v149 = vunpack.c.l.b16 %v74
  %v150 = vunpack.c.l.b16 %v75
  %v151 = vunpack.c.l.b16 %v76
  %v152 = vunpack.c.l.b16 %v77
  %v153 = vunpack.c.l.b16 %v78
  %v154 = vunpack.c.l.b16 %v79
  %v155 = vunpack.c.l.b16 %v80
  %v156 = vunpack.c.l.b16 %v81
  %v157 = vunpack.c.l.b16 %v82
  %v158 = vunpack.c.l.b16 %v83
  %v159 = vunpack.c.l.b16 %v84
  %v160 = vunpack.c.l.b16 %v85
  %v161 = vunpack.c.l.b16 %v86
  %v162 = vunpack.c.l.b16 %v87
  %v163 = vunpack.c.l.b16 %v88
  %v164 = vunpack.c.l.b16 %v89
  %v165 = vunpack.c.l.b16 %v90
  %v166 = vunpack.c.l.b16 %v91
  %v167 = vunpack.c.l.b16 %v92
  %v168 = vunpack.c.l.b16 %v93
  %v169 = vunpack.c.l.b16 %v94
  %v170 = vunpack.c.l.b16 %v95
  %v171 = vpack.c.b16 %v140, %v139
  %v172 = vpack.c.b16 %v142, %v141
  %v173 = vpack.c.b16 %v144, %v143
  %v174 = vpack.c.b16 %v146, %v145
  %v175 = vpack.c.b16 %v148, %v147
  %v176 = vpack.c.b16 %v150, %v149
  %v177 = vpack.c.b16 %v152, %v151
  %v178 = vpack.c.b16 %v154, %v153
  %v179 = vpack.c.b16 %v156, %v155
  %v180 = vpack.c.b16 %v158, %v157
  %v181 = vpack.c.b16 %v160, %v159
  %v182 = vpack.c.b16 %v162, %v161
  %v183 = vpack.c.b16 %v164, %v163
  %v184 = vpack.c.b16 %v166, %v165
  %v185 = vpack.c.b16 %v168, %v167
  %v186 = vpack.c.b16 %v170, %v169
  %v191 = vunpack.c.l.b16 %v96
  %v192 = vunpack.c.l.b16 %v97
  %v193 = vunpack.c.l.b16 %v98
  %v194 = vunpack.c.l.b16 %v99
  %v195 = vpack.c.b16 %v192, %v191
  %v196 = vpack.c.b16 %v194, %v193
  %vm199 = vcmask 261120
  %v201 = vsel %vm199, %v171, 0
  %v204 = vsel %vm199, %v172, 0
  %v207 = vsel %vm199, %v173, 0
  %v210 = vsel %vm199, %v174, 0
  %v213 = vsel %vm199, %v175, 0
  %v216 = vsel %vm199, %v176, 0
  %v219 = vsel %vm199, %v177, 0
  %v222 = vsel %vm199, %v178, 0
  %v225 = vsel %vm199, %v179, 0
  %v228 = vsel %vm199, %v180, 0
  %v231 = vsel %vm199, %v181, 0
  %v234 = vsel %vm199, %v182, 0
  %v237 = vsel %vm199, %v183, 0
  %v240 = vsel %vm199, %v184, 0
  %v243 = vsel %vm199, %v185, 0
  %v246 = vsel %vm199, %v186, 0
  %248 = vmatprep.subr.bf16.mxu0 0
  %249 = vmatpush1.bf16.msra.mxu0 %v195
  %250 = vmatprep.subr.bf16.mxu0 0
  %251 = vmatpush1.bf16.msra.mxu0 %v196
  %252 = vmatprep.subr.bf16.mxu0 0
  %253 = vmatpush1.bf16.msra.mxu0 0
  %254 = vmatprep.subr.bf16.mxu0 0
  %255 = vmatpush1.bf16.msra.mxu0 0
  %256 = vmatprep.subr.bf16.mxu0 0
  %257 = vmatpush1.bf16.msra.mxu0 0
  %258 = vmatprep.subr.bf16.mxu0 0
  %259 = vmatpush1.bf16.msra.mxu0 0
  %260 = vmatprep.subr.bf16.mxu0 0
  %261 = vmatpush1.bf16.msra.mxu0 0
  %262 = vmatprep.subr.bf16.mxu0 0
  %263 = vmatpush1.bf16.msra.mxu0 0
  %264 = vmatprep.subr.bf16.mxu0 0
  %265 = vmatpush1.bf16.msra.mxu0 0
  %266 = vmatprep.subr.bf16.mxu0 0
  %267 = vmatpush1.bf16.msra.mxu0 0
  %268 = vmatprep.subr.bf16.mxu0 0
  %269 = vmatpush1.bf16.msra.mxu0 0
  %270 = vmatprep.subr.bf16.mxu0 0
  %271 = vmatpush1.bf16.msra.mxu0 0
  %272 = vmatprep.subr.bf16.mxu0 0
  %273 = vmatpush1.bf16.msra.mxu0 0
  %274 = vmatprep.subr.bf16.mxu0 0
  %275 = vmatpush1.bf16.msra.mxu0 0
  %276 = vmatprep.subr.bf16.mxu0 0
  %277 = vmatpush1.bf16.msra.mxu0 0
  %278 = vmatprep.subr.bf16.mxu0 0
  %279 = vmatpush1.bf16.msra.mxu0 0
  %280 = vmatprep.mubr.bf16.mxu0 0
  %281 = vmatmul.mubr.bf16.gmra.mrb[0].mxu0 %v201
  %v282 = vpop.f32.mrb[0].mxu0
  %v283 = vadd.f32 %v105, %v282
  %v284 = vpop.f32.mrb[0].mxu0
  %v285 = vpop.f32.mrb[0].mxu0
  %v286 = vadd.f32 %v105, %v285
  %v287 = vpop.f32.mrb[0].mxu0
  %288 = vmatprep.mubr.bf16.mxu0 0
  %289 = vmatmul.mubr.bf16.gmra.mrb[0].mxu0 %v204
  %v290 = vpop.f32.mrb[0].mxu0
  %v291 = vadd.f32 %v105, %v290
  %v292 = vpop.f32.mrb[0].mxu0
  %v293 = vpop.f32.mrb[0].mxu0
  %v294 = vadd.f32 %v105, %v293
  %v295 = vpop.f32.mrb[0].mxu0
  %296 = vmatprep.mubr.bf16.mxu0 0
  %297 = vmatmul.mubr.bf16.gmra.mrb[0].mxu0 %v207
  %v298 = vpop.f32.mrb[0].mxu0
  %v299 = vadd.f32 %v105, %v298
  %v300 = vpop.f32.mrb[0].mxu0
  %v301 = vpop.f32.mrb[0].mxu0
  %v302 = vadd.f32 %v105, %v301
  %v303 = vpop.f32.mrb[0].mxu0
  %304 = vmatprep.mubr.bf16.mxu0 0
  %305 = vmatmul.mubr.bf16.gmra.mrb[0].mxu0 %v210
  %v306 = vpop.f32.mrb[0].mxu0
  %v307 = vadd.f32 %v105, %v306
  %v308 = vpop.f32.mrb[0].mxu0
  %v309 = vpop.f32.mrb[0].mxu0
  %v310 = vadd.f32 %v105, %v309
  %v311 = vpop.f32.mrb[0].mxu0
  %312 = vmatprep.mubr.bf16.mxu0 0
  %313 = vmatmul.mubr.bf16.gmra.mrb[0].mxu0 %v213
  %v314 = vpop.f32.mrb[0].mxu0
  %v315 = vadd.f32 %v105, %v314
  %v316 = vpop.f32.mrb[0].mxu0
  %v317 = vpop.f32.mrb[0].mxu0
  %v318 = vadd.f32 %v105, %v317
  %v319 = vpop.f32.mrb[0].mxu0
  %320 = vmatprep.mubr.bf16.mxu0 0
  %321 = vmatmul.mubr.bf16.gmra.mrb[0].mxu0 %v216
  %v322 = vpop.f32.mrb[0].mxu0
  %v323 = vadd.f32 %v105, %v322
  %v324 = vpop.f32.mrb[0].mxu0
  %v325 = vpop.f32.mrb[0].mxu0
  %v326 = vadd.f32 %v105, %v325
  %v327 = vpop.f32.mrb[0].mxu0
  %328 = vmatprep.mubr.bf16.mxu0 0
  %329 = vmatmul.mubr.bf16.gmra.mrb[0].mxu0 %v219
  %v330 = vpop.f32.mrb[0].mxu0
  %v331 = vadd.f32 %v105, %v330
  %v332 = vpop.f32.mrb[0].mxu0
  %v333 = vpop.f32.mrb[0].mxu0
  %v334 = vadd.f32 %v105, %v333
  %v335 = vpop.f32.mrb[0].mxu0
  %336 = vmatprep.mubr.bf16.mxu0 0
  %337 = vmatmul.mubr.bf16.gmra.mrb[0].mxu0 %v222
  %v338 = vpop.f32.mrb[0].mxu0
  %v339 = vadd.f32 %v105, %v338
  %v340 = vpop.f32.mrb[0].mxu0
  %v341 = vpop.f32.mrb[0].mxu0
  %v342 = vadd.f32 %v105, %v341
  %v343 = vpop.f32.mrb[0].mxu0
  %344 = vmatprep.mubr.bf16.mxu0 0
  %345 = vmatmul.mubr.bf16.gmra.mrb[0].mxu0 %v225
  %v346 = vpop.f32.mrb[0].mxu0
  %v347 = vadd.f32 %v105, %v346
  %v348 = vpop.f32.mrb[0].mxu0
  %v349 = vpop.f32.mrb[0].mxu0
  %v350 = vadd.f32 %v105, %v349
  %v351 = vpop.f32.mrb[0].mxu0
  %352 = vmatprep.mubr.bf16.mxu0 0
  %353 = vmatmul.mubr.bf16.gmra.mrb[0].mxu0 %v228
  %v354 = vpop.f32.mrb[0].mxu0
  %v355 = vadd.f32 %v105, %v354
  %v356 = vpop.f32.mrb[0].mxu0
  %v357 = vpop.f32.mrb[0].mxu0
  %v358 = vadd.f32 %v105, %v357
  %v359 = vpop.f32.mrb[0].mxu0
  %360 = vmatprep.mubr.bf16.mxu0 0
  %361 = vmatmul.mubr.bf16.gmra.mrb[0].mxu0 %v231
  %v362 = vpop.f32.mrb[0].mxu0
  %v363 = vadd.f32 %v105, %v362
  %v364 = vpop.f32.mrb[0].mxu0
  %v365 = vpop.f32.mrb[0].mxu0
  %v366 = vadd.f32 %v105, %v365
  %v367 = vpop.f32.mrb[0].mxu0
  %368 = vmatprep.mubr.bf16.mxu0 0
  %369 = vmatmul.mubr.bf16.gmra.mrb[0].mxu0 %v234
  %v370 = vpop.f32.mrb[0].mxu0
  %v371 = vadd.f32 %v105, %v370
  %v372 = vpop.f32.mrb[0].mxu0
  %v373 = vpop.f32.mrb[0].mxu0
  %v374 = vadd.f32 %v105, %v373
  %v375 = vpop.f32.mrb[0].mxu0
  %376 = vmatprep.mubr.bf16.mxu0 0
  %377 = vmatmul.mubr.bf16.gmra.mrb[0].mxu0 %v237
  %v378 = vpop.f32.mrb[0].mxu0
  %v379 = vadd.f32 %v105, %v378
  %v380 = vpop.f32.mrb[0].mxu0
  %v381 = vpop.f32.mrb[0].mxu0
  %v382 = vadd.f32 %v105, %v381
  %v383 = vpop.f32.mrb[0].mxu0
  %384 = vmatprep.mubr.bf16.mxu0 0
  %385 = vmatmul.mubr.bf16.gmra.mrb[0].mxu0 %v240
  %v386 = vpop.f32.mrb[0].mxu0
  %v387 = vadd.f32 %v105, %v386
  %v388 = vpop.f32.mrb[0].mxu0
  %v389 = vpop.f32.mrb[0].mxu0
  %v390 = vadd.f32 %v105, %v389
  %v391 = vpop.f32.mrb[0].mxu0
  %392 = vmatprep.mubr.bf16.mxu0 0
  %393 = vmatmul.mubr.bf16.gmra.mrb[0].mxu0 %v243
  %v394 = vpop.f32.mrb[0].mxu0
  %v395 = vadd.f32 %v105, %v394
  %v396 = vpop.f32.mrb[0].mxu0
  %v397 = vpop.f32.mrb[0].mxu0
  %v398 = vadd.f32 %v105, %v397
  %v399 = vpop.f32.mrb[0].mxu0
  %400 = vmatprep.mubr.bf16.mxu0 0
  %401 = vmatmul.mubr.bf16.gmra.mrb[0].mxu0 %v246
  %v402 = vpop.f32.mrb[0].mxu0
  %v403 = vadd.f32 %v105, %v402
  %v404 = vpop.f32.mrb[0].mxu0
  %v405 = vpop.f32.mrb[0].mxu0
  %v406 = vadd.f32 %v105, %v405
  %v407 = vpop.f32.mrb[0].mxu0
  %408 = vdwg.mxu0
  %v409 = vld [vmem:[%s3] sm:$0xf]
  %v410 = vld [vmem:[%s3 + $0x4] sm:$0xf]
  %v411 = vld [vmem:[%s3 + $0x8] sm:$0xf]
  %v412 = vld [vmem:[%s3 + $0xc] sm:$0xf]
  %v413 = vld [vmem:[%s4] sm:$0x1]
  %v415 = vlaneseq
  %v416 = vshrl.u32 %v415, 7
  %v417 = vsub.s32 0, %v416
  %v418 = vrot.slane %v413, %v417
  %v424 = vunpack.c.l.b16 %v409
  %v425 = vunpack.c.l.b16 %v410
  %v426 = vunpack.c.l.b16 %v411
  %v427 = vunpack.c.l.b16 %v412
  %v428 = vpack.c.b16 %v425, %v424
  %v429 = vpack.c.b16 %v427, %v426
  %432 = vmatprep.subr.bf16.mxu0 0
  %433 = vmatpush1.bf16.msra.mxu0 %v428
  %434 = vmatprep.subr.bf16.mxu0 0
  %435 = vmatpush1.bf16.msra.mxu0 %v429
  %436 = vmatprep.subr.bf16.mxu0 0
  %437 = vmatpush1.bf16.msra.mxu0 0
  %438 = vmatprep.subr.bf16.mxu0 0
  %439 = vmatpush1.bf16.msra.mxu0 0
  %440 = vmatprep.subr.bf16.mxu0 0
  %441 = vmatpush1.bf16.msra.mxu0 0
  %442 = vmatprep.subr.bf16.mxu0 0
  %443 = vmatpush1.bf16.msra.mxu0 0
  %444 = vmatprep.subr.bf16.mxu0 0
  %445 = vmatpush1.bf16.msra.mxu0 0
  %446 = vmatprep.subr.bf16.mxu0 0
  %447 = vmatpush1.bf16.msra.mxu0 0
  %448 = vmatprep.subr.bf16.mxu0 0
  %449 = vmatpush1.bf16.msra.mxu0 0
  %450 = vmatprep.subr.bf16.mxu0 0
  %451 = vmatpush1.bf16.msra.mxu0 0
  %452 = vmatprep.subr.bf16.mxu0 0
  %453 = vmatpush1.bf16.msra.mxu0 0
  %454 = vmatprep.subr.bf16.mxu0 0
  %455 = vmatpush1.bf16.msra.mxu0 0
  %456 = vmatprep.subr.bf16.mxu0 0
  %457 = vmatpush1.bf16.msra.mxu0 0
  %458 = vmatprep.subr.bf16.mxu0 0
  %459 = vmatpush1.bf16.msra.mxu0 0
  %460 = vmatprep.subr.bf16.mxu0 0
  %461 = vmatpush1.bf16.msra.mxu0 0
  %462 = vmatprep.subr.bf16.mxu0 0
  %463 = vmatpush1.bf16.msra.mxu0 0
  %464 = vmatprep.mubr.bf16.mxu0 0
  %465 = vmatmul.mubr.bf16.gmra.mrb[0].mxu0 %v201
  %v466 = vpop.f32.mrb[0].mxu0
  %v467 = vadd.f32 %v418, %v466
  %v468 = vpop.f32.mrb[0].mxu0
  %v469 = vpop.f32.mrb[0].mxu0
  %v470 = vadd.f32 %v418, %v469
  %v471 = vpop.f32.mrb[0].mxu0
  %472 = vmatprep.mubr.bf16.mxu0 0
  %473 = vmatmul.mubr.bf16.gmra.mrb[0].mxu0 %v204
  %v474 = vpop.f32.mrb[0].mxu0
  %v475 = vadd.f32 %v418, %v474
  %v476 = vpop.f32.mrb[0].mxu0
  %v477 = vpop.f32.mrb[0].mxu0
  %v478 = vadd.f32 %v418, %v477
  %v479 = vpop.f32.mrb[0].mxu0
  %480 = vmatprep.mubr.bf16.mxu0 0
  %481 = vmatmul.mubr.bf16.gmra.mrb[0].mxu0 %v207
  %v482 = vpop.f32.mrb[0].mxu0
  %v483 = vadd.f32 %v418, %v482
  %v484 = vpop.f32.mrb[0].mxu0
  %v485 = vpop.f32.mrb[0].mxu0
  %v486 = vadd.f32 %v418, %v485
  %v487 = vpop.f32.mrb[0].mxu0
  %488 = vmatprep.mubr.bf16.mxu0 0
  %489 = vmatmul.mubr.bf16.gmra.mrb[0].mxu0 %v210
  %v490 = vpop.f32.mrb[0].mxu0
  %v491 = vadd.f32 %v418, %v490
  %v492 = vpop.f32.mrb[0].mxu0
  %v493 = vpop.f32.mrb[0].mxu0
  %v494 = vadd.f32 %v418, %v493
  %v495 = vpop.f32.mrb[0].mxu0
  %496 = vmatprep.mubr.bf16.mxu0 0
  %497 = vmatmul.mubr.bf16.gmra.mrb[0].mxu0 %v213
  %v498 = vpop.f32.mrb[0].mxu0
  %v499 = vadd.f32 %v418, %v498
  %v500 = vpop.f32.mrb[0].mxu0
  %v501 = vpop.f32.mrb[0].mxu0
  %v502 = vadd.f32 %v418, %v501
  %v503 = vpop.f32.mrb[0].mxu0
  %504 = vmatprep.mubr.bf16.mxu0 0
  %505 = vmatmul.mubr.bf16.gmra.mrb[0].mxu0 %v216
  %v506 = vpop.f32.mrb[0].mxu0
  %v507 = vadd.f32 %v418, %v506
  %v508 = vpop.f32.mrb[0].mxu0
  %v509 = vpop.f32.mrb[0].mxu0
  %v510 = vadd.f32 %v418, %v509
  %v511 = vpop.f32.mrb[0].mxu0
  %512 = vmatprep.mubr.bf16.mxu0 0
  %513 = vmatmul.mubr.bf16.gmra.mrb[0].mxu0 %v219
  %v514 = vpop.f32.mrb[0].mxu0
  %v515 = vadd.f32 %v418, %v514
  %v516 = vpop.f32.mrb[0].mxu0
  %v517 = vpop.f32.mrb[0].mxu0
  %v518 = vadd.f32 %v418, %v517
  %v519 = vpop.f32.mrb[0].mxu0
  %520 = vmatprep.mubr.bf16.mxu0 0
  %521 = vmatmul.mubr.bf16.gmra.mrb[0].mxu0 %v222
  %v522 = vpop.f32.mrb[0].mxu0
  %v523 = vadd.f32 %v418, %v522
  %v524 = vpop.f32.mrb[0].mxu0
  %v525 = vpop.f32.mrb[0].mxu0
  %v526 = vadd.f32 %v418, %v525
  %v527 = vpop.f32.mrb[0].mxu0
  %528 = vmatprep.mubr.bf16.mxu0 0
  %529 = vmatmul.mubr.bf16.gmra.mrb[0].mxu0 %v225
  %v530 = vpop.f32.mrb[0].mxu0
  %v531 = vadd.f32 %v418, %v530
  %v532 = vpop.f32.mrb[0].mxu0
  %v533 = vpop.f32.mrb[0].mxu0
  %v534 = vadd.f32 %v418, %v533
  %v535 = vpop.f32.mrb[0].mxu0
  %536 = vmatprep.mubr.bf16.mxu0 0
  %537 = vmatmul.mubr.bf16.gmra.mrb[0].mxu0 %v228
  %v538 = vpop.f32.mrb[0].mxu0
  %v539 = vadd.f32 %v418, %v538
  %v540 = vpop.f32.mrb[0].mxu0
  %v541 = vpop.f32.mrb[0].mxu0
  %v542 = vadd.f32 %v418, %v541
  %v543 = vpop.f32.mrb[0].mxu0
  %544 = vmatprep.mubr.bf16.mxu0 0
  %545 = vmatmul.mubr.bf16.gmra.mrb[0].mxu0 %v231
  %v546 = vpop.f32.mrb[0].mxu0
  %v547 = vadd.f32 %v418, %v546
  %v548 = vpop.f32.mrb[0].mxu0
  %v549 = vpop.f32.mrb[0].mxu0
  %v550 = vadd.f32 %v418, %v549
  %v551 = vpop.f32.mrb[0].mxu0
  %552 = vmatprep.mubr.bf16.mxu0 0
  %553 = vmatmul.mubr.bf16.gmra.mrb[0].mxu0 %v234
  %v554 = vpop.f32.mrb[0].mxu0
  %v555 = vadd.f32 %v418, %v554
  %v556 = vpop.f32.mrb[0].mxu0
  %v557 = vpop.f32.mrb[0].mxu0
  %v558 = vadd.f32 %v418, %v557
  %v559 = vpop.f32.mrb[0].mxu0
  %560 = vmatprep.mubr.bf16.mxu0 0
  %561 = vmatmul.mubr.bf16.gmra.mrb[0].mxu0 %v237
  %v562 = vpop.f32.mrb[0].mxu0
  %v563 = vadd.f32 %v418, %v562
  %v564 = vpop.f32.mrb[0].mxu0
  %v565 = vpop.f32.mrb[0].mxu0
  %v566 = vadd.f32 %v418, %v565
  %v567 = vpop.f32.mrb[0].mxu0
  %568 = vmatprep.mubr.bf16.mxu0 0
  %569 = vmatmul.mubr.bf16.gmra.mrb[0].mxu0 %v240
  %v570 = vpop.f32.mrb[0].mxu0
  %v571 = vadd.f32 %v418, %v570
  %v572 = vpop.f32.mrb[0].mxu0
  %v573 = vpop.f32.mrb[0].mxu0
  %v574 = vadd.f32 %v418, %v573
  %v575 = vpop.f32.mrb[0].mxu0
  %576 = vmatprep.mubr.bf16.mxu0 0
  %577 = vmatmul.mubr.bf16.gmra.mrb[0].mxu0 %v243
  %v578 = vpop.f32.mrb[0].mxu0
  %v579 = vadd.f32 %v418, %v578
  %v580 = vpop.f32.mrb[0].mxu0
  %v581 = vpop.f32.mrb[0].mxu0
  %v582 = vadd.f32 %v418, %v581
  %v583 = vpop.f32.mrb[0].mxu0
  %584 = vmatprep.mubr.bf16.mxu0 0
  %585 = vmatmul.mubr.bf16.gmra.mrb[0].mxu0 %v246
  %v586 = vpop.f32.mrb[0].mxu0
  %v587 = vadd.f32 %v418, %v586
  %v588 = vpop.f32.mrb[0].mxu0
  %v589 = vpop.f32.mrb[0].mxu0
  %v590 = vadd.f32 %v418, %v589
  %v591 = vpop.f32.mrb[0].mxu0
  %592 = vdwg.mxu0
  %v593 = vxor.u32 %v467, 2147483648
  %v594 = vxor.u32 %v470, 2147483648
  %v595 = vxor.u32 %v475, 2147483648
  %v596 = vxor.u32 %v478, 2147483648
  %v597 = vxor.u32 %v483, 2147483648
  %v598 = vxor.u32 %v486, 2147483648
  %v599 = vxor.u32 %v491, 2147483648
  %v600 = vxor.u32 %v494, 2147483648
  %v601 = vxor.u32 %v499, 2147483648
  %v602 = vxor.u32 %v502, 2147483648
  %v603 = vxor.u32 %v507, 2147483648
  %v604 = vxor.u32 %v510, 2147483648
  %v605 = vxor.u32 %v515, 2147483648
  %v606 = vxor.u32 %v518, 2147483648
  %v607 = vxor.u32 %v523, 2147483648
  %v608 = vxor.u32 %v526, 2147483648
  %v609 = vxor.u32 %v531, 2147483648
  %v610 = vxor.u32 %v534, 2147483648
  %v611 = vxor.u32 %v539, 2147483648
  %v612 = vxor.u32 %v542, 2147483648
  %v613 = vxor.u32 %v547, 2147483648
  %v614 = vxor.u32 %v550, 2147483648
  %v615 = vxor.u32 %v555, 2147483648
  %v616 = vxor.u32 %v558, 2147483648
  %v617 = vxor.u32 %v563, 2147483648
  %v618 = vxor.u32 %v566, 2147483648
  %v619 = vxor.u32 %v571, 2147483648
  %v620 = vxor.u32 %v574, 2147483648
  %v621 = vxor.u32 %v579, 2147483648
  %v622 = vxor.u32 %v582, 2147483648
  %v623 = vxor.u32 %v587, 2147483648
  %v624 = vxor.u32 %v590, 2147483648
  %v625 = vmul.f32 %v593, 1.442695
  %v626 = vpow.pop %v625
  %v627 = vmul.f32 %v594, 1.442695
  %v628 = vpow.pop %v627
  %v629 = vmul.f32 %v595, 1.442695
  %v630 = vpow.pop %v629
  %v631 = vmul.f32 %v596, 1.442695
  %v632 = vpow.pop %v631
  %v633 = vmul.f32 %v597, 1.442695
  %v634 = vpow.pop %v633
  %v635 = vmul.f32 %v598, 1.442695
  %v636 = vpow.pop %v635
  %v637 = vmul.f32 %v599, 1.442695
  %v638 = vpow.pop %v637
  %v639 = vmul.f32 %v600, 1.442695
  %v640 = vpow.pop %v639
  %v641 = vmul.f32 %v601, 1.442695
  %v642 = vpow.pop %v641
  %v643 = vmul.f32 %v602, 1.442695
  %v644 = vpow.pop %v643
  %v645 = vmul.f32 %v603, 1.442695
  %v646 = vpow.pop %v645
  %v647 = vmul.f32 %v604, 1.442695
  %v648 = vpow.pop %v647
  %v649 = vmul.f32 %v605, 1.442695
  %v650 = vpow.pop %v649
  %v651 = vmul.f32 %v606, 1.442695
  %v652 = vpow.pop %v651
  %v653 = vmul.f32 %v607, 1.442695
  %v654 = vpow.pop %v653
  %v655 = vmul.f32 %v608, 1.442695
  %v656 = vpow.pop %v655
  %v657 = vmul.f32 %v609, 1.442695
  %v658 = vpow.pop %v657
  %v659 = vmul.f32 %v610, 1.442695
  %v660 = vpow.pop %v659
  %v661 = vmul.f32 %v611, 1.442695
  %v662 = vpow.pop %v661
  %v663 = vmul.f32 %v612, 1.442695
  %v664 = vpow.pop %v663
  %v665 = vmul.f32 %v613, 1.442695
  %v666 = vpow.pop %v665
  %v667 = vmul.f32 %v614, 1.442695
  %v668 = vpow.pop %v667
  %v669 = vmul.f32 %v615, 1.442695
  %v670 = vpow.pop %v669
  %v671 = vmul.f32 %v616, 1.442695
  %v672 = vpow.pop %v671
  %v673 = vmul.f32 %v617, 1.442695
  %v674 = vpow.pop %v673
  %v675 = vmul.f32 %v618, 1.442695
  %v676 = vpow.pop %v675
  %v677 = vmul.f32 %v619, 1.442695
  %v678 = vpow.pop %v677
  %v679 = vmul.f32 %v620, 1.442695
  %v680 = vpow.pop %v679
  %v681 = vmul.f32 %v621, 1.442695
  %v682 = vpow.pop %v681
  %v683 = vmul.f32 %v622, 1.442695
  %v684 = vpow.pop %v683
  %v685 = vmul.f32 %v623, 1.442695
  %v686 = vpow.pop %v685
  %v687 = vmul.f32 %v624, 1.442695
  %v688 = vpow.pop %v687
  %v689 = vadd.f32 %v626, 1.0
  %v690 = vadd.f32 %v628, 1.0
  %v691 = vadd.f32 %v630, 1.0
  %v692 = vadd.f32 %v632, 1.0
  %v693 = vadd.f32 %v634, 1.0
  %v694 = vadd.f32 %v636, 1.0
  %v695 = vadd.f32 %v638, 1.0
  %v696 = vadd.f32 %v640, 1.0
  %v697 = vadd.f32 %v642, 1.0
  %v698 = vadd.f32 %v644, 1.0
  %v699 = vadd.f32 %v646, 1.0
  %v700 = vadd.f32 %v648, 1.0
  %v701 = vadd.f32 %v650, 1.0
  %v702 = vadd.f32 %v652, 1.0
  %v703 = vadd.f32 %v654, 1.0
  %v704 = vadd.f32 %v656, 1.0
  %v705 = vadd.f32 %v658, 1.0
  %v706 = vadd.f32 %v660, 1.0
  %v707 = vadd.f32 %v662, 1.0
  %v708 = vadd.f32 %v664, 1.0
  %v709 = vadd.f32 %v666, 1.0
  %v710 = vadd.f32 %v668, 1.0
  %v711 = vadd.f32 %v670, 1.0
  %v712 = vadd.f32 %v672, 1.0
  %v713 = vadd.f32 %v674, 1.0
  %v714 = vadd.f32 %v676, 1.0
  %v715 = vadd.f32 %v678, 1.0
  %v716 = vadd.f32 %v680, 1.0
  %v717 = vadd.f32 %v682, 1.0
  %v718 = vadd.f32 %v684, 1.0
  %v719 = vadd.f32 %v686, 1.0
  %v720 = vadd.f32 %v688, 1.0
  %v721 = vrcp.pop %v689
  %v722 = vmul.f32 1.0, %v721
  %v723 = vrcp.pop %v690
  %v724 = vmul.f32 1.0, %v723
  %v725 = vrcp.pop %v691
  %v726 = vmul.f32 1.0, %v725
  %v727 = vrcp.pop %v692
  %v728 = vmul.f32 1.0, %v727
  %v729 = vrcp.pop %v693
  %v730 = vmul.f32 1.0, %v729
  %v731 = vrcp.pop %v694
  %v732 = vmul.f32 1.0, %v731
  %v733 = vrcp.pop %v695
  %v734 = vmul.f32 1.0, %v733
  %v735 = vrcp.pop %v696
  %v736 = vmul.f32 1.0, %v735
  %v737 = vrcp.pop %v697
  %v738 = vmul.f32 1.0, %v737
  %v739 = vrcp.pop %v698
  %v740 = vmul.f32 1.0, %v739
  %v741 = vrcp.pop %v699
  %v742 = vmul.f32 1.0, %v741
  %v743 = vrcp.pop %v700
  %v744 = vmul.f32 1.0, %v743
  %v745 = vrcp.pop %v701
  %v746 = vmul.f32 1.0, %v745
  %v747 = vrcp.pop %v702
  %v748 = vmul.f32 1.0, %v747
  %v749 = vrcp.pop %v703
  %v750 = vmul.f32 1.0, %v749
  %v751 = vrcp.pop %v704
  %v752 = vmul.f32 1.0, %v751
  %v753 = vrcp.pop %v705
  %v754 = vmul.f32 1.0, %v753
  %v755 = vrcp.pop %v706
  %v756 = vmul.f32 1.0, %v755
  %v757 = vrcp.pop %v707
  %v758 = vmul.f32 1.0, %v757
  %v759 = vrcp.pop %v708
  %v760 = vmul.f32 1.0, %v759
  %v761 = vrcp.pop %v709
  %v762 = vmul.f32 1.0, %v761
  %v763 = vrcp.pop %v710
  %v764 = vmul.f32 1.0, %v763
  %v765 = vrcp.pop %v711
  %v766 = vmul.f32 1.0, %v765
  %v767 = vrcp.pop %v712
  %v768 = vmul.f32 1.0, %v767
  %v769 = vrcp.pop %v713
  %v770 = vmul.f32 1.0, %v769
  %v771 = vrcp.pop %v714
  %v772 = vmul.f32 1.0, %v771
  %v773 = vrcp.pop %v715
  %v774 = vmul.f32 1.0, %v773
  %v775 = vrcp.pop %v716
  %v776 = vmul.f32 1.0, %v775
  %v777 = vrcp.pop %v717
  %v778 = vmul.f32 1.0, %v777
  %v779 = vrcp.pop %v718
  %v780 = vmul.f32 1.0, %v779
  %v781 = vrcp.pop %v719
  %v782 = vmul.f32 1.0, %v781
  %v783 = vrcp.pop %v720
  %v784 = vmul.f32 1.0, %v783
  %v785 = vmul.f32 %v467, %v722
  %v786 = vmul.f32 %v470, %v724
  %v787 = vmul.f32 %v475, %v726
  %v788 = vmul.f32 %v478, %v728
  %v789 = vmul.f32 %v483, %v730
  %v790 = vmul.f32 %v486, %v732
  %v791 = vmul.f32 %v491, %v734
  %v792 = vmul.f32 %v494, %v736
  %v793 = vmul.f32 %v499, %v738
  %v794 = vmul.f32 %v502, %v740
  %v795 = vmul.f32 %v507, %v742
  %v796 = vmul.f32 %v510, %v744
  %v797 = vmul.f32 %v515, %v746
  %v798 = vmul.f32 %v518, %v748
  %v799 = vmul.f32 %v523, %v750
  %v800 = vmul.f32 %v526, %v752
  %v801 = vmul.f32 %v531, %v754
  %v802 = vmul.f32 %v534, %v756
  %v803 = vmul.f32 %v539, %v758
  %v804 = vmul.f32 %v542, %v760
  %v805 = vmul.f32 %v547, %v762
  %v806 = vmul.f32 %v550, %v764
  %v807 = vmul.f32 %v555, %v766
  %v808 = vmul.f32 %v558, %v768
  %v809 = vmul.f32 %v563, %v770
  %v810 = vmul.f32 %v566, %v772
  %v811 = vmul.f32 %v571, %v774
  %v812 = vmul.f32 %v574, %v776
  %v813 = vmul.f32 %v579, %v778
  %v814 = vmul.f32 %v582, %v780
  %v815 = vmul.f32 %v587, %v782
  %v816 = vmul.f32 %v590, %v784
  %v817 = vmul.f32 %v283, %v785
  %v818 = vmul.f32 %v286, %v786
  %v819 = vmul.f32 %v291, %v787
  %v820 = vmul.f32 %v294, %v788
  %v821 = vmul.f32 %v299, %v789
  %v822 = vmul.f32 %v302, %v790
  %v823 = vmul.f32 %v307, %v791
  %v824 = vmul.f32 %v310, %v792
  %v825 = vmul.f32 %v315, %v793
  %v826 = vmul.f32 %v318, %v794
  %v827 = vmul.f32 %v323, %v795
  %v828 = vmul.f32 %v326, %v796
  %v829 = vmul.f32 %v331, %v797
  %v830 = vmul.f32 %v334, %v798
  %v831 = vmul.f32 %v339, %v799
  %v832 = vmul.f32 %v342, %v800
  %v833 = vmul.f32 %v347, %v801
  %v834 = vmul.f32 %v350, %v802
  %v835 = vmul.f32 %v355, %v803
  %v836 = vmul.f32 %v358, %v804
  %v837 = vmul.f32 %v363, %v805
  %v838 = vmul.f32 %v366, %v806
  %v839 = vmul.f32 %v371, %v807
  %v840 = vmul.f32 %v374, %v808
  %v841 = vmul.f32 %v379, %v809
  %v842 = vmul.f32 %v382, %v810
  %v843 = vmul.f32 %v387, %v811
  %v844 = vmul.f32 %v390, %v812
  %v845 = vmul.f32 %v395, %v813
  %v846 = vmul.f32 %v398, %v814
  %v847 = vmul.f32 %v403, %v815
  %v848 = vmul.f32 %v406, %v816
  %v849 = vld [vmem:[#allocation2] sm:$0xff]
  %v850 = vld [vmem:[#allocation2 + $0x8] sm:$0xff]
  %v851 = vld [vmem:[#allocation2 + $0x10] sm:$0xff]
  %v852 = vld [vmem:[#allocation2 + $0x18] sm:$0xff]
  %v853 = vld [vmem:[#allocation2 + $0x20] sm:$0xff]
  %v854 = vld [vmem:[#allocation2 + $0x28] sm:$0xff]
  %v855 = vld [vmem:[#allocation2 + $0x30] sm:$0xff]
  %v856 = vld [vmem:[#allocation2 + $0x38] sm:$0xff]
  %v857 = vld [vmem:[#allocation2 + $0x40] sm:$0xff]
  %v858 = vld [vmem:[#allocation2 + $0x48] sm:$0xff]
  %v859 = vld [vmem:[#allocation2 + $0x50] sm:$0xff]
  %v860 = vld [vmem:[#allocation2 + $0x58] sm:$0xff]
  %v861 = vld [vmem:[#allocation2 + $0x60] sm:$0xff]
  %v862 = vld [vmem:[#allocation2 + $0x68] sm:$0xff]
  %v863 = vld [vmem:[#allocation2 + $0x70] sm:$0xff]
  %v864 = vld [vmem:[#allocation2 + $0x78] sm:$0xff]
  %v865 = vld [vmem:[#allocation2 + $0x80] sm:$0xff]
  %v866 = vld [vmem:[#allocation2 + $0x88] sm:$0xff]
  %v867 = vld [vmem:[#allocation2 + $0x90] sm:$0xff]
  %v868 = vld [vmem:[#allocation2 + $0x98] sm:$0xff]
  %v869 = vld [vmem:[#allocation2 + $0xa0] sm:$0xff]
  %v870 = vld [vmem:[#allocation2 + $0xa8] sm:$0xff]
  %v871 = vld [vmem:[#allocation2 + $0xb0] sm:$0xff]
  %v872 = vld [vmem:[#allocation2 + $0xb8] sm:$0xff]
  %v873 = vld [vmem:[#allocation2 + $0xc0] sm:$0xff]
  %v874 = vld [vmem:[#allocation2 + $0xc8] sm:$0xff]
  %v875 = vld [vmem:[#allocation2 + $0xd0] sm:$0xff]
  %v876 = vld [vmem:[#allocation2 + $0xd8] sm:$0xff]
  %v877 = vld [vmem:[#allocation2 + $0xe0] sm:$0xff]
  %v878 = vld [vmem:[#allocation2 + $0xe8] sm:$0xff]
  %v879 = vld [vmem:[#allocation2 + $0xf0] sm:$0xff]
  %v880 = vld [vmem:[#allocation2 + $0xf8] sm:$0xff]
  %v881 = vpack.c.bf16 %v818, %v817
  %v882 = vpack.c.bf16 %v820, %v819
  %v883 = vpack.c.bf16 %v822, %v821
  %v884 = vpack.c.bf16 %v824, %v823
  %v885 = vpack.c.bf16 %v826, %v825
  %v886 = vpack.c.bf16 %v828, %v827
  %v887 = vpack.c.bf16 %v830, %v829
  %v888 = vpack.c.bf16 %v832, %v831
  %v889 = vpack.c.bf16 %v834, %v833
  %v890 = vpack.c.bf16 %v836, %v835
  %v891 = vpack.c.bf16 %v838, %v837
  %v892 = vpack.c.bf16 %v840, %v839
  %v893 = vpack.c.bf16 %v842, %v841
  %v894 = vpack.c.bf16 %v844, %v843
  %v895 = vpack.c.bf16 %v846, %v845
  %v896 = vpack.c.bf16 %v848, %v847
  %v897 = vld [vmem:[%s5] sm:$0xf]
  %v898 = vld [vmem:[%s5 + $0x4] sm:$0xf]
  %v899 = vld [vmem:[%s5 + $0x8] sm:$0xf]
  %v900 = vld [vmem:[%s5 + $0xc] sm:$0xf]
  %v901 = vld [vmem:[%s5 + $0x10] sm:$0xf]
  %v902 = vld [vmem:[%s5 + $0x14] sm:$0xf]
  %v903 = vld [vmem:[%s5 + $0x18] sm:$0xf]
  %v904 = vld [vmem:[%s5 + $0x1c] sm:$0xf]
  %v905 = vld [vmem:[%s5 + $0x20] sm:$0xf]
  %v906 = vld [vmem:[%s5 + $0x24] sm:$0xf]
  %v907 = vld [vmem:[%s5 + $0x28] sm:$0xf]
  %v908 = vld [vmem:[%s5 + $0x2c] sm:$0xf]
  %v909 = vld [vmem:[%s5 + $0x30] sm:$0xf]
  %v910 = vld [vmem:[%s5 + $0x34] sm:$0xf]
  %v911 = vld [vmem:[%s5 + $0x38] sm:$0xf]
  %v912 = vld [vmem:[%s5 + $0x3c] sm:$0xf]
  %v929 = vunpack.c.l.b16 %v897
  %v930 = vunpack.c.l.b16 %v898
  %v931 = vunpack.c.l.b16 %v899
  %v932 = vunpack.c.l.b16 %v900
  %v933 = vunpack.c.l.b16 %v901
  %v934 = vunpack.c.l.b16 %v902
  %v935 = vunpack.c.l.b16 %v903
  %v936 = vunpack.c.l.b16 %v904
  %v937 = vunpack.c.l.b16 %v905
  %v938 = vunpack.c.l.b16 %v906
  %v939 = vunpack.c.l.b16 %v907
  %v940 = vunpack.c.l.b16 %v908
  %v941 = vunpack.c.l.b16 %v909
  %v942 = vunpack.c.l.b16 %v910
  %v943 = vunpack.c.l.b16 %v911
  %v944 = vunpack.c.l.b16 %v912
  %v945 = vpack.c.b16 %v930, %v929
  %v946 = vpack.c.b16 %v932, %v931
  %v947 = vpack.c.b16 %v934, %v933
  %v948 = vpack.c.b16 %v936, %v935
  %v949 = vpack.c.b16 %v938, %v937
  %v950 = vpack.c.b16 %v940, %v939
  %v951 = vpack.c.b16 %v942, %v941
  %v952 = vpack.c.b16 %v944, %v943
  %961 = vmatprep.subr.bf16.mxu0 0
  %962 = vmatpush1.bf16.msra.mxu0 %v945
  %963 = vmatprep.subr.bf16.mxu0 0
  %964 = vmatpush1.bf16.msra.mxu0 %v946
  %965 = vmatprep.subr.bf16.mxu0 0
  %966 = vmatpush1.bf16.msra.mxu0 %v947
  %967 = vmatprep.subr.bf16.mxu0 0
  %968 = vmatpush1.bf16.msra.mxu0 %v948
  %969 = vmatprep.subr.bf16.mxu0 0
  %970 = vmatpush1.bf16.msra.mxu0 %v949
  %971 = vmatprep.subr.bf16.mxu0 0
  %972 = vmatpush1.bf16.msra.mxu0 %v950
  %973 = vmatprep.subr.bf16.mxu0 0
  %974 = vmatpush1.bf16.msra.mxu0 %v951
  %975 = vmatprep.subr.bf16.mxu0 0
  %976 = vmatpush1.bf16.msra.mxu0 %v952
  %977 = vmatprep.subr.bf16.mxu0 0
  %978 = vmatpush1.bf16.msra.mxu0 0
  %979 = vmatprep.subr.bf16.mxu0 0
  %980 = vmatpush1.bf16.msra.mxu0 0
  %981 = vmatprep.subr.bf16.mxu0 0
  %982 = vmatpush1.bf16.msra.mxu0 0
  %983 = vmatprep.subr.bf16.mxu0 0
  %984 = vmatpush1.bf16.msra.mxu0 0
  %985 = vmatprep.subr.bf16.mxu0 0
  %986 = vmatpush1.bf16.msra.mxu0 0
  %987 = vmatprep.subr.bf16.mxu0 0
  %988 = vmatpush1.bf16.msra.mxu0 0
  %989 = vmatprep.subr.bf16.mxu0 0
  %990 = vmatpush1.bf16.msra.mxu0 0
  %991 = vmatprep.subr.bf16.mxu0 0
  %992 = vmatpush1.bf16.msra.mxu0 0
  %993 = vmatprep.mubr.bf16.mxu0 0
  %994 = vmatmul.mubr.bf16.gmra.mrb[0].mxu0 %v881
  %v995 = vpop.f32.mrb[0].mxu0
  %v996 = vadd.f32 0.0, %v995
  %v997 = vpop.f32.mrb[0].mxu0
  %v998 = vpop.f32.mrb[0].mxu0
  %v999 = vadd.f32 0.0, %v998
  %v1000 = vpop.f32.mrb[0].mxu0
  %1001 = vmatprep.mubr.bf16.mxu0 0
  %1002 = vmatmul.mubr.bf16.gmra.mrb[0].mxu0 %v882
  %v1003 = vpop.f32.mrb[0].mxu0
  %v1004 = vadd.f32 0.0, %v1003
  %v1005 = vpop.f32.mrb[0].mxu0
  %v1006 = vpop.f32.mrb[0].mxu0
  %v1007 = vadd.f32 0.0, %v1006
  %v1008 = vpop.f32.mrb[0].mxu0
  %1009 = vmatprep.mubr.bf16.mxu0 0
  %1010 = vmatmul.mubr.bf16.gmra.mrb[0].mxu0 %v883
  %v1011 = vpop.f32.mrb[0].mxu0
  %v1012 = vadd.f32 0.0, %v1011
  %v1013 = vpop.f32.mrb[0].mxu0
  %v1014 = vpop.f32.mrb[0].mxu0
  %v1015 = vadd.f32 0.0, %v1014
  %v1016 = vpop.f32.mrb[0].mxu0
  %1017 = vmatprep.mubr.bf16.mxu0 0
  %1018 = vmatmul.mubr.bf16.gmra.mrb[0].mxu0 %v884
  %v1019 = vpop.f32.mrb[0].mxu0
  %v1020 = vadd.f32 0.0, %v1019
  %v1021 = vpop.f32.mrb[0].mxu0
  %v1022 = vpop.f32.mrb[0].mxu0
  %v1023 = vadd.f32 0.0, %v1022
  %v1024 = vpop.f32.mrb[0].mxu0
  %1025 = vmatprep.mubr.bf16.mxu0 0
  %1026 = vmatmul.mubr.bf16.gmra.mrb[0].mxu0 %v885
  %v1027 = vpop.f32.mrb[0].mxu0
  %v1028 = vadd.f32 0.0, %v1027
  %v1029 = vpop.f32.mrb[0].mxu0
  %v1030 = vpop.f32.mrb[0].mxu0
  %v1031 = vadd.f32 0.0, %v1030
  %v1032 = vpop.f32.mrb[0].mxu0
  %1033 = vmatprep.mubr.bf16.mxu0 0
  %1034 = vmatmul.mubr.bf16.gmra.mrb[0].mxu0 %v886
  %v1035 = vpop.f32.mrb[0].mxu0
  %v1036 = vadd.f32 0.0, %v1035
  %v1037 = vpop.f32.mrb[0].mxu0
  %v1038 = vpop.f32.mrb[0].mxu0
  %v1039 = vadd.f32 0.0, %v1038
  %v1040 = vpop.f32.mrb[0].mxu0
  %1041 = vmatprep.mubr.bf16.mxu0 0
  %1042 = vmatmul.mubr.bf16.gmra.mrb[0].mxu0 %v887
  %v1043 = vpop.f32.mrb[0].mxu0
  %v1044 = vadd.f32 0.0, %v1043
  %v1045 = vpop.f32.mrb[0].mxu0
  %v1046 = vpop.f32.mrb[0].mxu0
  %v1047 = vadd.f32 0.0, %v1046
  %v1048 = vpop.f32.mrb[0].mxu0
  %1049 = vmatprep.mubr.bf16.mxu0 0
  %1050 = vmatmul.mubr.bf16.gmra.mrb[0].mxu0 %v888
  %v1051 = vpop.f32.mrb[0].mxu0
  %v1052 = vadd.f32 0.0, %v1051
  %v1053 = vpop.f32.mrb[0].mxu0
  %v1054 = vpop.f32.mrb[0].mxu0
  %v1055 = vadd.f32 0.0, %v1054
  %v1056 = vpop.f32.mrb[0].mxu0
  %1057 = vmatprep.mubr.bf16.mxu0 0
  %1058 = vmatmul.mubr.bf16.gmra.mrb[0].mxu0 %v889
  %v1059 = vpop.f32.mrb[0].mxu0
  %v1060 = vadd.f32 0.0, %v1059
  %v1061 = vpop.f32.mrb[0].mxu0
  %v1062 = vpop.f32.mrb[0].mxu0
  %v1063 = vadd.f32 0.0, %v1062
  %v1064 = vpop.f32.mrb[0].mxu0
  %1065 = vmatprep.mubr.bf16.mxu0 0
  %1066 = vmatmul.mubr.bf16.gmra.mrb[0].mxu0 %v890
  %v1067 = vpop.f32.mrb[0].mxu0
  %v1068 = vadd.f32 0.0, %v1067
  %v1069 = vpop.f32.mrb[0].mxu0
  %v1070 = vpop.f32.mrb[0].mxu0
  %v1071 = vadd.f32 0.0, %v1070
  %v1072 = vpop.f32.mrb[0].mxu0
  %1073 = vmatprep.mubr.bf16.mxu0 0
  %1074 = vmatmul.mubr.bf16.gmra.mrb[0].mxu0 %v891
  %v1075 = vpop.f32.mrb[0].mxu0
  %v1076 = vadd.f32 0.0, %v1075
  %v1077 = vpop.f32.mrb[0].mxu0
  %v1078 = vpop.f32.mrb[0].mxu0
  %v1079 = vadd.f32 0.0, %v1078
  %v1080 = vpop.f32.mrb[0].mxu0
  %1081 = vmatprep.mubr.bf16.mxu0 0
  %1082 = vmatmul.mubr.bf16.gmra.mrb[0].mxu0 %v892
  %v1083 = vpop.f32.mrb[0].mxu0
  %v1084 = vadd.f32 0.0, %v1083
  %v1085 = vpop.f32.mrb[0].mxu0
  %v1086 = vpop.f32.mrb[0].mxu0
  %v1087 = vadd.f32 0.0, %v1086
  %v1088 = vpop.f32.mrb[0].mxu0
  %1089 = vmatprep.mubr.bf16.mxu0 0
  %1090 = vmatmul.mubr.bf16.gmra.mrb[0].mxu0 %v893
  %v1091 = vpop.f32.mrb[0].mxu0
  %v1092 = vadd.f32 0.0, %v1091
  %v1093 = vpop.f32.mrb[0].mxu0
  %v1094 = vpop.f32.mrb[0].mxu0
  %v1095 = vadd.f32 0.0, %v1094
  %v1096 = vpop.f32.mrb[0].mxu0
  %1097 = vmatprep.mubr.bf16.mxu0 0
  %1098 = vmatmul.mubr.bf16.gmra.mrb[0].mxu0 %v894
  %v1099 = vpop.f32.mrb[0].mxu0
  %v1100 = vadd.f32 0.0, %v1099
  %v1101 = vpop.f32.mrb[0].mxu0
  %v1102 = vpop.f32.mrb[0].mxu0
  %v1103 = vadd.f32 0.0, %v1102
  %v1104 = vpop.f32.mrb[0].mxu0
  %1105 = vmatprep.mubr.bf16.mxu0 0
  %1106 = vmatmul.mubr.bf16.gmra.mrb[0].mxu0 %v895
  %v1107 = vpop.f32.mrb[0].mxu0
  %v1108 = vadd.f32 0.0, %v1107
  %v1109 = vpop.f32.mrb[0].mxu0
  %v1110 = vpop.f32.mrb[0].mxu0
  %v1111 = vadd.f32 0.0, %v1110
  %v1112 = vpop.f32.mrb[0].mxu0
  %1113 = vmatprep.mubr.bf16.mxu0 0
  %1114 = vmatmul.mubr.bf16.gmra.mrb[0].mxu0 %v896
  %v1115 = vpop.f32.mrb[0].mxu0
  %v1116 = vadd.f32 0.0, %v1115
  %v1117 = vpop.f32.mrb[0].mxu0
  %v1118 = vpop.f32.mrb[0].mxu0
  %v1119 = vadd.f32 0.0, %v1118
  %v1120 = vpop.f32.mrb[0].mxu0
  %1121 = vdwg.mxu0
  %v1122 = vadd.f32 %v849, %v996
  %v1123 = vadd.f32 %v850, %v999
  %v1124 = vadd.f32 %v851, %v1004
  %v1125 = vadd.f32 %v852, %v1007
  %v1126 = vadd.f32 %v853, %v1012
  %v1127 = vadd.f32 %v854, %v1015
  %v1128 = vadd.f32 %v855, %v1020
  %v1129 = vadd.f32 %v856, %v1023
  %v1130 = vadd.f32 %v857, %v1028
  %v1131 = vadd.f32 %v858, %v1031
  %v1132 = vadd.f32 %v859, %v1036
  %v1133 = vadd.f32 %v860, %v1039
  %v1134 = vadd.f32 %v861, %v1044
  %v1135 = vadd.f32 %v862, %v1047
  %v1136 = vadd.f32 %v863, %v1052
  %v1137 = vadd.f32 %v864, %v1055
  %v1138 = vadd.f32 %v865, %v1060
  %v1139 = vadd.f32 %v866, %v1063
  %v1140 = vadd.f32 %v867, %v1068
  %v1141 = vadd.f32 %v868, %v1071
  %v1142 = vadd.f32 %v869, %v1076
  %v1143 = vadd.f32 %v870, %v1079
  %v1144 = vadd.f32 %v871, %v1084
  %v1145 = vadd.f32 %v872, %v1087
  %v1146 = vadd.f32 %v873, %v1092
  %v1147 = vadd.f32 %v874, %v1095
  %v1148 = vadd.f32 %v875, %v1100
  %v1149 = vadd.f32 %v876, %v1103
  %v1150 = vadd.f32 %v877, %v1108
  %v1151 = vadd.f32 %v878, %v1111
  %v1152 = vadd.f32 %v879, %v1116
  %v1153 = vadd.f32 %v880, %v1119
  %1154 = vst.msk [vmem:[#allocation2] sm:$0xff] %vm199, %v1122
  %1155 = vst.msk [vmem:[#allocation2 + $0x8] sm:$0xff] %vm199, %v1123
  %1156 = vst.msk [vmem:[#allocation2 + $0x10] sm:$0xff] %vm199, %v1124
  %1157 = vst.msk [vmem:[#allocation2 + $0x18] sm:$0xff] %vm199, %v1125
  %1158 = vst.msk [vmem:[#allocation2 + $0x20] sm:$0xff] %vm199, %v1126
  %1159 = vst.msk [vmem:[#allocation2 + $0x28] sm:$0xff] %vm199, %v1127
  %1160 = vst.msk [vmem:[#allocation2 + $0x30] sm:$0xff] %vm199, %v1128
  %1161 = vst.msk [vmem:[#allocation2 + $0x38] sm:$0xff] %vm199, %v1129
  %1162 = vst.msk [vmem:[#allocation2 + $0x40] sm:$0xff] %vm199, %v1130
  %1163 = vst.msk [vmem:[#allocation2 + $0x48] sm:$0xff] %vm199, %v1131
  %1164 = vst.msk [vmem:[#allocation2 + $0x50] sm:$0xff] %vm199, %v1132
  %1165 = vst.msk [vmem:[#allocation2 + $0x58] sm:$0xff] %vm199, %v1133
  %1166 = vst.msk [vmem:[#allocation2 + $0x60] sm:$0xff] %vm199, %v1134
  %1167 = vst.msk [vmem:[#allocation2 + $0x68] sm:$0xff] %vm199, %v1135
  %1168 = vst.msk [vmem:[#allocation2 + $0x70] sm:$0xff] %vm199, %v1136
  %1169 = vst.msk [vmem:[#allocation2 + $0x78] sm:$0xff] %vm199, %v1137
  %1170 = vst.msk [vmem:[#allocation2 + $0x80] sm:$0xff] %vm199, %v1138
  %1171 = vst.msk [vmem:[#allocation2 + $0x88] sm:$0xff] %vm199, %v1139
  %1172 = vst.msk [vmem:[#allocation2 + $0x90] sm:$0xff] %vm199, %v1140
  %1173 = vst.msk [vmem:[#allocation2 + $0x98] sm:$0xff] %vm199, %v1141
  %1174 = vst.msk [vmem:[#allocation2 + $0xa0] sm:$0xff] %vm199, %v1142
  %1175 = vst.msk [vmem:[#allocation2 + $0xa8] sm:$0xff] %vm199, %v1143
  %1176 = vst.msk [vmem:[#allocation2 + $0xb0] sm:$0xff] %vm199, %v1144
  %1177 = vst.msk [vmem:[#allocation2 + $0xb8] sm:$0xff] %vm199, %v1145
  %1178 = vst.msk [vmem:[#allocation2 + $0xc0] sm:$0xff] %vm199, %v1146
  %1179 = vst.msk [vmem:[#allocation2 + $0xc8] sm:$0xff] %vm199, %v1147
  %1180 = vst.msk [vmem:[#allocation2 + $0xd0] sm:$0xff] %vm199, %v1148
  %1181 = vst.msk [vmem:[#allocation2 + $0xd8] sm:$0xff] %vm199, %v1149
  %1182 = vst.msk [vmem:[#allocation2 + $0xe0] sm:$0xff] %vm199, %v1150
  %1183 = vst.msk [vmem:[#allocation2 + $0xe8] sm:$0xff] %vm199, %v1151
  %1184 = vst.msk [vmem:[#allocation2 + $0xf0] sm:$0xff] %vm199, %v1152
  %1185 = vst.msk [vmem:[#allocation2 + $0xf8] sm:$0xff] %vm199, %v1153
  // Predicated region
  $region34: #{tpu_custom_call.1} parent=0 // pred_check
    %p1186 = pneg %p27
  $region35: #{tpu_custom_call.1} parent=0 // pred_check_branch
    %1188 = sbr.rel (%p1186) target = $region37
  $region36: #{tpu_custom_call.1} parent=0 // pred_region
    %v1189 = vld [vmem:[#allocation2] sm:$0xff]
    %v1190 = vld [vmem:[#allocation2 + $0x8] sm:$0xff]
    %v1191 = vld [vmem:[#allocation2 + $0x10] sm:$0xff]
    %v1192 = vld [vmem:[#allocation2 + $0x18] sm:$0xff]
    %v1193 = vld [vmem:[#allocation2 + $0x20] sm:$0xff]
    %v1194 = vld [vmem:[#allocation2 + $0x28] sm:$0xff]
    %v1195 = vld [vmem:[#allocation2 + $0x30] sm:$0xff]
    %v1196 = vld [vmem:[#allocation2 + $0x38] sm:$0xff]
    %v1197 = vld [vmem:[#allocation2 + $0x40] sm:$0xff]
    %v1198 = vld [vmem:[#allocation2 + $0x48] sm:$0xff]
    %v1199 = vld [vmem:[#allocation2 + $0x50] sm:$0xff]
    %v1200 = vld [vmem:[#allocation2 + $0x58] sm:$0xff]
    %v1201 = vld [vmem:[#allocation2 + $0x60] sm:$0xff]
    %v1202 = vld [vmem:[#allocation2 + $0x68] sm:$0xff]
    %v1203 = vld [vmem:[#allocation2 + $0x70] sm:$0xff]
    %v1204 = vld [vmem:[#allocation2 + $0x78] sm:$0xff]
    %v1205 = vld [vmem:[#allocation2 + $0x80] sm:$0xff]
    %v1206 = vld [vmem:[#allocation2 + $0x88] sm:$0xff]
    %v1207 = vld [vmem:[#allocation2 + $0x90] sm:$0xff]
    %v1208 = vld [vmem:[#allocation2 + $0x98] sm:$0xff]
    %v1209 = vld [vmem:[#allocation2 + $0xa0] sm:$0xff]
    %v1210 = vld [vmem:[#allocation2 + $0xa8] sm:$0xff]
    %v1211 = vld [vmem:[#allocation2 + $0xb0] sm:$0xff]
    %v1212 = vld [vmem:[#allocation2 + $0xb8] sm:$0xff]
    %v1213 = vld [vmem:[#allocation2 + $0xc0] sm:$0xff]
    %v1214 = vld [vmem:[#allocation2 + $0xc8] sm:$0xff]
    %v1215 = vld [vmem:[#allocation2 + $0xd0] sm:$0xff]
    %v1216 = vld [vmem:[#allocation2 + $0xd8] sm:$0xff]
    %v1217 = vld [vmem:[#allocation2 + $0xe0] sm:$0xff]
    %v1218 = vld [vmem:[#allocation2 + $0xe8] sm:$0xff]
    %v1219 = vld [vmem:[#allocation2 + $0xf0] sm:$0xff]
    %v1220 = vld [vmem:[#allocation2 + $0xf8] sm:$0xff]
    %v1221 = vld [vmem:[%s6] sm:$0x1]
    %v1223 = vlaneseq
    %v1224 = vshrl.u32 %v1223, 7
    %v1225 = vsub.s32 0, %v1224
    %v1226 = vrot.slane %v1221, %v1225
    %v1228 = vadd.f32 %v1189, %v1226
    %v1229 = vadd.f32 %v1190, %v1226
    %v1230 = vadd.f32 %v1191, %v1226
    %v1231 = vadd.f32 %v1192, %v1226
    %v1232 = vadd.f32 %v1193, %v1226
    %v1233 = vadd.f32 %v1194, %v1226
    %v1234 = vadd.f32 %v1195, %v1226
    %v1235 = vadd.f32 %v1196, %v1226
    %v1236 = vadd.f32 %v1197, %v1226
    %v1237 = vadd.f32 %v1198, %v1226
    %v1238 = vadd.f32 %v1199, %v1226
    %v1239 = vadd.f32 %v1200, %v1226
    %v1240 = vadd.f32 %v1201, %v1226
    %v1241 = vadd.f32 %v1202, %v1226
    %v1242 = vadd.f32 %v1203, %v1226
    %v1243 = vadd.f32 %v1204, %v1226
    %v1244 = vadd.f32 %v1205, %v1226
    %v1245 = vadd.f32 %v1206, %v1226
    %v1246 = vadd.f32 %v1207, %v1226
    %v1247 = vadd.f32 %v1208, %v1226
    %v1248 = vadd.f32 %v1209, %v1226
    %v1249 = vadd.f32 %v1210, %v1226
    %v1250 = vadd.f32 %v1211, %v1226
    %v1251 = vadd.f32 %v1212, %v1226
    %v1252 = vadd.f32 %v1213, %v1226
    %v1253 = vadd.f32 %v1214, %v1226
    %v1254 = vadd.f32 %v1215, %v1226
    %v1255 = vadd.f32 %v1216, %v1226
    %v1256 = vadd.f32 %v1217, %v1226
    %v1257 = vadd.f32 %v1218, %v1226
    %v1258 = vadd.f32 %v1219, %v1226
    %v1259 = vadd.f32 %v1220, %v1226
    %1260 = vst.msk [vmem:[%s7] sm:$0xff] %vm199, %v1228
    %1261 = vst.msk [vmem:[%s7 + $0x8] sm:$0xff] %vm199, %v1229
    %1262 = vst.msk [vmem:[%s7 + $0x10] sm:$0xff] %vm199, %v1230
    %1263 = vst.msk [vmem:[%s7 + $0x18] sm:$0xff] %vm199, %v1231
    %1264 = vst.msk [vmem:[%s7 + $0x20] sm:$0xff] %vm199, %v1232
    %1265 = vst.msk [vmem:[%s7 + $0x28] sm:$0xff] %vm199, %v1233
    %1266 = vst.msk [vmem:[%s7 + $0x30] sm:$0xff] %vm199, %v1234
    %1267 = vst.msk [vmem:[%s7 + $0x38] sm:$0xff] %vm199, %v1235
    %1268 = vst.msk [vmem:[%s7 + $0x40] sm:$0xff] %vm199, %v1236
    %1269 = vst.msk [vmem:[%s7 + $0x48] sm:$0xff] %vm199, %v1237
    %1270 = vst.msk [vmem:[%s7 + $0x50] sm:$0xff] %vm199, %v1238
    %1271 = vst.msk [vmem:[%s7 + $0x58] sm:$0xff] %vm199, %v1239
    %1272 = vst.msk [vmem:[%s7 + $0x60] sm:$0xff] %vm199, %v1240
    %1273 = vst.msk [vmem:[%s7 + $0x68] sm:$0xff] %vm199, %v1241
    %1274 = vst.msk [vmem:[%s7 + $0x70] sm:$0xff] %vm199, %v1242
    %1275 = vst.msk [vmem:[%s7 + $0x78] sm:$0xff] %vm199, %v1243
    %1276 = vst.msk [vmem:[%s7 + $0x80] sm:$0xff] %vm199, %v1244
    %1277 = vst.msk [vmem:[%s7 + $0x88] sm:$0xff] %vm199, %v1245
    %1278 = vst.msk [vmem:[%s7 + $0x90] sm:$0xff] %vm199, %v1246
    %1279 = vst.msk [vmem:[%s7 + $0x98] sm:$0xff] %vm199, %v1247
    %1280 = vst.msk [vmem:[%s7 + $0xa0] sm:$0xff] %vm199, %v1248
    %1281 = vst.msk [vmem:[%s7 + $0xa8] sm:$0xff] %vm199, %v1249
    %1282 = vst.msk [vmem:[%s7 + $0xb0] sm:$0xff] %vm199, %v1250
    %1283 = vst.msk [vmem:[%s7 + $0xb8] sm:$0xff] %vm199, %v1251
    %1284 = vst.msk [vmem:[%s7 + $0xc0] sm:$0xff] %vm199, %v1252
    %1285 = vst.msk [vmem:[%s7 + $0xc8] sm:$0xff] %vm199, %v1253
    %1286 = vst.msk [vmem:[%s7 + $0xd0] sm:$0xff] %vm199, %v1254
    %1287 = vst.msk [vmem:[%s7 + $0xd8] sm:$0xff] %vm199, %v1255
    %1288 = vst.msk [vmem:[%s7 + $0xe0] sm:$0xff] %vm199, %v1256
    %1289 = vst.msk [vmem:[%s7 + $0xe8] sm:$0xff] %vm199, %v1257
    %1290 = vst.msk [vmem:[%s7 + $0xf0] sm:$0xff] %vm199, %v1258
    %1291 = vst.msk [vmem:[%s7 + $0xf8] sm:$0xff] %vm199, %v1259
  $region37: #{tpu_custom_call.1} parent=0 // pred_fallthru
    _
  // Predicated region
  $region38: #{tpu_custom_call.1} parent=0 // pred_check
    _
  $region39: #{tpu_custom_call.1} parent=0 // pred_check_branch
    %1293 = sbr.rel (0) target = $region41
  $region40: #{tpu_custom_call.1} parent=0 // pred_region
    _
  $region41: #{tpu_custom_call.1} parent=0 // pred_fallthru
    _
  // Predicated region
  $region42: #{tpu_custom_call.1} parent=0 // pred_check
    _
  $region43: #{tpu_custom_call.1} parent=0 // pred_check_branch
    %1295 = sbr.rel (0) target = $region45
  $region44: #{tpu_custom_call.1} parent=0 // pred_region
    _
  $region45: #{tpu_custom_call.1} parent=0 // pred_fallthru
    _

</llo_original>
